<compile_context>
chip_gen: v7x
topology: tpu7x:2x2x1
jax: 0.10.0
libtpu: 0.0.40
codegen_flags: <defaults>
</compile_context>

<pallas_src>
import functools

import jax
import jax.numpy as jnp
from jax import lax
from jax.experimental import pallas as pl
from jax.experimental.pallas import tpu as pltpu


_MIB = 1024 * 1024
# Tile caps.  With bf16 operands + f32 accumulator the double-buffered tiles
# at these caps total ≈7 MiB — far under every generation's scoped-VMEM budget.
_TM_CAP, _TN_CAP, _TK_CAP = 512, 512, 1024


def _round_up(x, m):
    return (x + m - 1) // m * m


def _pick_tile(dim, cap, align, min_blocks=1):
    """Largest tile (multiple of `align`, <= cap) dividing round_up(dim, align).

    Exact division means no per-call padding beyond the alignment pad.
    `min_blocks=2` keeps a 'parallel' grid axis splittable across the two
    TensorCores of a v7x megacore when possible.
    """
    dim_a = _round_up(dim, align)
    best = align
    t = align
    top = min(cap, dim_a)
    while t <= top:
        if dim_a % t == 0 and dim_a // t >= min_blocks:
            best = t
        t += align
    return best


def _vmem_limit_bytes():
    # Generation-aware scoped-VMEM request: ~3/4 of physical, capped at 64 MiB.
    # v5e/v6e (128 MiB physical) -> 64 MiB; v7x (64 MiB physical) -> 48 MiB.
    try:
        phys = int(pltpu.get_tpu_info().vmem_capacity_bytes)
    except Exception:
        phys = 64 * _MIB  # conservative fallback (v7x per-core size)
    return int(min(64 * _MIB, max(32 * _MIB, (phys * 3) // 4)))


# ----------------------------------------------------------------------------
# Forward kernels: one (tm, tn) output tile, K accumulated across grid axis 2.
# ----------------------------------------------------------------------------
def _matmul_bias_kernel(x_ref, w_ref, b_ref, o_ref, acc_ref):
    k = pl.program_id(2)

    @pl.when(k == 0)
    def _init():
        # Fold bias into the accumulator init: one broadcast per output tile,
        # no zero-fill, no bias add on the per-K critical path.
        acc_ref[...] = jnp.broadcast_to(
            b_ref[...].astype(jnp.float32), acc_ref.shape
        )

    acc_ref[...] += jnp.dot(
        x_ref[...], w_ref[...], preferred_element_type=jnp.float32
    )

    @pl.when(k == pl.num_programs(2) - 1)
    def _finalize():
        o_ref[...] = acc_ref[...].astype(o_ref.dtype)


def _matmul_kernel(x_ref, w_ref, o_ref, acc_ref):
    k = pl.program_id(2)

    @pl.when(k == 0)
    def _init():
        acc_ref[...] = jnp.zeros_like(acc_ref)

    acc_ref[...] += jnp.dot(
        x_ref[...], w_ref[...], preferred_element_type=jnp.float32
    )

    @pl.when(k == pl.num_programs(2) - 1)
    def _finalize():
        o_ref[...] = acc_ref[...].astype(o_ref.dtype)


def pallas_linear(x2d, w, b=None, *, tm=None, tn=None, tk=None,
                  compute_dtype=jnp.bfloat16, out_dtype=None):
    """y = x2d @ w (+ b) with a tiled Pallas TPU matmul.

    x2d: [M, K], w: [K, N], b: [1, N] or None  ->  y: [M, N].
    Operands are cast to `compute_dtype` (bf16 by default) for the MXU; the
    accumulator stays f32 and the output is written in `out_dtype`.
    """
    M, K = x2d.shape
    K2, N = w.shape
    assert K == K2, (K, K2)
    if out_dtype is None:
        out_dtype = x2d.dtype

    if tm is None:
        tm = _pick_tile(M, _TM_CAP, 8)
    Mp = _round_up(M, tm)
    if tn is None:
        # If M gives a single block, split N so v7x's two TCs both get work.
        tn = _pick_tile(N, _TN_CAP, 128, min_blocks=2 if Mp // tm == 1 else 1)
    if tk is None:
        tk = _pick_tile(K, _TK_CAP, 128)
    Kp = _round_up(K, tk)
    Np = _round_up(N, tn)

    xc = x2d.astype(compute_dtype)
    wc = w.astype(compute_dtype)
    if (Mp, Kp) != (M, K):
        xc = jnp.pad(xc, ((0, Mp - M), (0, Kp - K)))
    if (Kp, Np) != (K, N):
        wc = jnp.pad(wc, ((0, Kp - K), (0, Np - N)))

    has_bias = b is not None
    in_specs = [
        pl.BlockSpec((tm, tk), lambda i, j, k: (i, k)),
        pl.BlockSpec((tk, tn), lambda i, j, k: (k, j)),
    ]
    operands = [xc, wc]
    kernel = _matmul_kernel
    if has_bias:
        bc = b if b.ndim == 2 else b[None, :]
        if bc.shape[1] != Np:
            bc = jnp.pad(bc, ((0, 0), (0, Np - bc.shape[1])))
        in_specs.append(pl.BlockSpec((1, tn), lambda i, j, k: (0, j)))
        operands.append(bc)
        kernel = _matmul_bias_kernel

    grid = (Mp // tm, Np // tn, Kp // tk)

    itemsize = jnp.dtype(compute_dtype).itemsize
    bytes_accessed = (
        Mp * Kp * itemsize * (Np // tn)        # x re-read once per N block
        + Kp * Np * itemsize * (Mp // tm)      # w re-read once per M block
        + Mp * Np * jnp.dtype(out_dtype).itemsize
    )

    y = pl.pallas_call(
        kernel,
        out_shape=jax.ShapeDtypeStruct((Mp, Np), out_dtype),
        grid_spec=pltpu.PrefetchScalarGridSpec(
            num_scalar_prefetch=0,
            grid=grid,
            in_specs=in_specs,
            out_specs=pl.BlockSpec((tm, tn), lambda i, j, k: (i, j)),
            scratch_shapes=[pltpu.VMEM((tm, tn), jnp.float32)],
        ),
        compiler_params=pltpu.CompilerParams(
            dimension_semantics=("parallel", "parallel", "arbitrary"),
            vmem_limit_bytes=_vmem_limit_bytes(),
        ),
        cost_estimate=pl.CostEstimate(
            flops=2 * Mp * Kp * Np,
            transcendentals=0,
            bytes_accessed=bytes_accessed,
        ),
    )(*operands)

    if (Mp, Np) != (M, N):
        y = y[:M, :N]
    return y


# ----------------------------------------------------------------------------
# Backward kernel 1: dX = g @ W^T  (contract over N) — no W.T in HBM.
# ----------------------------------------------------------------------------
def _matmul_nt_kernel(g_ref, w_ref, o_ref, acc_ref):
    n = pl.program_id(2)

    @pl.when(n == 0)
    def _init():
        acc_ref[...] = jnp.zeros_like(acc_ref)

    # (tm, tn) x (tk, tn) contracted over the last dims -> (tm, tk)
    acc_ref[...] += lax.dot_general(
        g_ref[...], w_ref[...],
        dimension_numbers=(((1,), (1,)), ((), ())),
        preferred_element_type=jnp.float32,
    )

    @pl.when(n == pl.num_programs(2) - 1)
    def _finalize():
        o_ref[...] = acc_ref[...].astype(o_ref.dtype)


def pallas_matmul_nt(g, w, *, compute_dtype=jnp.bfloat16, out_dtype=None):
    """dX = g @ w.T without materializing w.T.  g: [M, N], w: [K, N]."""
    M, N = g.shape
    K, N2 = w.shape
    assert N == N2, (N, N2)
    if out_dtype is None:
        out_dtype = g.dtype

    tm = _pick_tile(M, _TM_CAP, 8)
    Mp = _round_up(M, tm)
    tk = _pick_tile(K, _TN_CAP, 128, min_blocks=2 if Mp // tm == 1 else 1)
    tn = _pick_tile(N, _TK_CAP, 128)
    Kp = _round_up(K, tk)
    Np = _round_up(N, tn)

    gc = g.astype(compute_dtype)
    wc = w.astype(compute_dtype)
    if (Mp, Np) != (M, N):
        gc = jnp.pad(gc, ((0, Mp - M), (0, Np - N)))
    if (Kp, Np) != (K, N):
        wc = jnp.pad(wc, ((0, Kp - K), (0, Np - N)))

    grid = (Mp // tm, Kp // tk, Np // tn)
    itemsize = jnp.dtype(compute_dtype).itemsize
    dx = pl.pallas_call(
        _matmul_nt_kernel,
        out_shape=jax.ShapeDtypeStruct((Mp, Kp), out_dtype),
        grid_spec=pltpu.PrefetchScalarGridSpec(
            num_scalar_prefetch=0,
            grid=grid,
            in_specs=[
                pl.BlockSpec((tm, tn), lambda i, j, n: (i, n)),
                pl.BlockSpec((tk, tn), lambda i, j, n: (j, n)),
            ],
            out_specs=pl.BlockSpec((tm, tk), lambda i, j, n: (i, j)),
            scratch_shapes=[pltpu.VMEM((tm, tk), jnp.float32)],
        ),
        compiler_params=pltpu.CompilerParams(
            dimension_semantics=("parallel", "parallel", "arbitrary"),
            vmem_limit_bytes=_vmem_limit_bytes(),
        ),
        cost_estimate=pl.CostEstimate(
            flops=2 * Mp * Kp * Np,
            transcendentals=0,
            bytes_accessed=(Mp * Np * itemsize * (Kp // tk)
                            + Kp * Np * itemsize * (Mp // tm)
                            + Mp * Kp * jnp.dtype(out_dtype).itemsize),
        ),
    )(gc, wc)

    if (Mp, Kp) != (M, K):
        dx = dx[:M, :K]
    return dx


# ----------------------------------------------------------------------------
# Backward kernel 2: dW = x^T @ g (contract over M) with db = sum_m g fused.
# ----------------------------------------------------------------------------
def _matmul_tn_dbias_kernel(x_ref, g_ref, dw_ref, db_ref, acc_ref, db_acc_ref):
    m = pl.program_id(2)

    @pl.when(m == 0)
    def _init():
        acc_ref[...] = jnp.zeros_like(acc_ref)
        db_acc_ref[...] = jnp.zeros_like(db_acc_ref)

    # (tm, tk) x (tm, tn) contracted over the leading dims -> (tk, tn)
    acc_ref[...] += lax.dot_general(
        x_ref[...], g_ref[...],
        dimension_numbers=(((0,), (0,)), ((), ())),
        preferred_element_type=jnp.float32,
    )
    # Fused bias-grad; recomputed per K-block (cheap XLU reduction) so every
    # write-back of the revisited (1, tn) db block carries the correct value.
    db_acc_ref[...] += jnp.sum(
        g_ref[...].astype(jnp.float32), axis=0, keepdims=True
    )

    @pl.when(m == pl.num_programs(2) - 1)
    def _finalize():
        dw_ref[...] = acc_ref[...].astype(dw_ref.dtype)
        db_ref[...] = db_acc_ref[...].astype(db_ref.dtype)


def pallas_matmul_tn(x2d, g, *, compute_dtype=jnp.bfloat16,
                     dw_dtype=jnp.float32, db_dtype=jnp.float32):
    """(dW, db) = (x2d.T @ g, sum_m g) without materializing x2d.T.

    x2d: [M, K], g: [M, N] -> dW: [K, N], db: [1, N].
    """
    M, K = x2d.shape
    M2, N = g.shape
    assert M == M2, (M, M2)

    tk = _pick_tile(K, _TM_CAP, 128)          # lane dim of x blocks -> 128-align
    Kp = _round_up(K, tk)
    tn = _pick_tile(N, _TN_CAP, 128, min_blocks=2 if Kp // tk == 1 else 1)
    tm = _pick_tile(M, _TK_CAP, 8)            # reduction dim
    Np = _round_up(N, tn)
    Mp = _round_up(M, tm)

    xc = x2d.astype(compute_dtype)
    gc = g.astype(compute_dtype)
    if (Mp, Kp) != (M, K):
        xc = jnp.pad(xc, ((0, Mp - M), (0, Kp - K)))
    if (Mp, Np) != (M, N):
        gc = jnp.pad(gc, ((0, Mp - M), (0, Np - N)))

    grid = (Kp // tk, Np // tn, Mp // tm)
    itemsize = jnp.dtype(compute_dtype).itemsize
    dw, db = pl.pallas_call(
        _matmul_tn_dbias_kernel,
        out_shape=(
            jax.ShapeDtypeStruct((Kp, Np), dw_dtype),
            jax.ShapeDtypeStruct((1, Np), db_dtype),
        ),
        grid_spec=pltpu.PrefetchScalarGridSpec(
            num_scalar_prefetch=0,
            grid=grid,
            in_specs=[
                pl.BlockSpec((tm, tk), lambda ki, nj, m: (m, ki)),
                pl.BlockSpec((tm, tn), lambda ki, nj, m: (m, nj)),
            ],
            out_specs=[
                pl.BlockSpec((tk, tn), lambda ki, nj, m: (ki, nj)),
                pl.BlockSpec((1, tn), lambda ki, nj, m: (0, nj)),
            ],
            scratch_shapes=[
                pltpu.VMEM((tk, tn), jnp.float32),
                pltpu.VMEM((1, tn), jnp.float32),
            ],
        ),
        compiler_params=pltpu.CompilerParams(
            dimension_semantics=("parallel", "parallel", "arbitrary"),
            vmem_limit_bytes=_vmem_limit_bytes(),
        ),
        cost_estimate=pl.CostEstimate(
            flops=2 * Mp * Kp * Np,
            transcendentals=0,
            bytes_accessed=(Mp * Kp * itemsize * (Np // tn)
                            + Mp * Np * itemsize * (Kp // tk)
                            + Kp * Np * jnp.dtype(dw_dtype).itemsize
                            + Np * jnp.dtype(db_dtype).itemsize),
        ),
    )(xc, gc)

    if (Kp, Np) != (K, N):
        dw = dw[:K, :N]
    if Np != N:
        db = db[:, :N]
    return dw, db


# ----------------------------------------------------------------------------
# custom_vjp so jax.checkpoint / jax.grad of the Pallas forward is well-defined
# ----------------------------------------------------------------------------
@jax.custom_vjp
def _linear(x2d, w, b):
    return pallas_linear(x2d, w, b)


def _linear_fwd(x2d, w, b):
    return pallas_linear(x2d, w, b), (x2d, w, b)


def _linear_bwd(res, g):
    x2d, w, b = res
    dx = pallas_matmul_nt(g, w, out_dtype=x2d.dtype)            # [M, K]
    dw, db = pallas_matmul_tn(x2d, g, dw_dtype=w.dtype,
                              db_dtype=b.dtype)                  # [K, N], [1, N]
    return dx, dw, db


_linear.defvjp(_linear_fwd, _linear_bwd)


# ----------------------------------------------------------------------------
# The wrapped module (equivalent of the nn.Module handed to CheckpointedLayer)
# ----------------------------------------------------------------------------
class LinearModule:
    """JAX equivalent of nn.Linear(H, H); forward runs in Pallas.

    The (static) weight / bias are pre-padded ONCE at construction to
    lane-aligned shapes, so no per-call jnp.pad of the parameters happens on
    the forward or the checkpointed-backward recompute.  Master weights stay
    f32 for optimizer precision; the bf16 cast for the MXU happens per call.
    """

    def __init__(self, w, b):
        K, N = w.shape
        self.k_in = K
        self.n_out = N
        Kp, Np = _round_up(K, 128), _round_up(N, 128)
        if (Kp, Np) != (K, N):
            w = jnp.pad(w, ((0, Kp - K), (0, Np - N)))
        if b.ndim == 1:
            b = b[None, :]
        if b.shape[1] != Np:
            b = jnp.pad(b, ((0, 0), (0, Np - b.shape[1])))
        self.w = w              # [Kp, Np]
        self.b = b              # [1, Np]
        self.k_in_padded = Kp

    def __call__(self, x):
        B, S, H = x.shape
        assert H == self.k_in
        x2d = x.reshape(B * S, H)
        if self.k_in_padded != H:
            x2d = jnp.pad(x2d, ((0, 0), (0, self.k_in_padded - H)))
        y2d = _linear(x2d, self.w, self.b)
        return y2d[:, : self.n_out].reshape(B, S, self.n_out)


# ----------------------------------------------------------------------------
# CheckpointedLayer: kwargs bypass checkpointing, positional args go through it
# ----------------------------------------------------------------------------
class CheckpointedLayer:
    def __init__(self, wrap):
        self.wrap = wrap

    def __call__(self, x, *args, **kwargs):
        # TODO(synk): PyTorch asserts kwarg tensors do not require grad; JAX
        # has no per-array requires_grad flag, so that assertion has no
        # equivalent here.
        partial = functools.partial(self.wrap, **kwargs)
        # torch.utils.checkpoint -> jax.checkpoint (identical forward values;
        # backward re-runs the Pallas forward instead of storing activations).
        return jax.checkpoint(partial)(x, *args)


# ----------------------------------------------------------------------------
# Driver
# ----------------------------------------------------------------------------
if __name__ == "__main__":
    B, S, H = 2, 8, 256   # lane-dense hidden (multiple of 128)

    key = jax.random.PRNGKey(0)
    kx, kw, kb, kg = jax.random.split(key, 4)

    x = jax.random.normal(kx, (B, S, H), dtype=jnp.float32)
    w = jax.random.normal(kw, (H, H), dtype=jnp.float32) / jnp.sqrt(H)
    b = jax.random.normal(kb, (1, H), dtype=jnp.float32) * 0.01

    layer = CheckpointedLayer(LinearModule(w, b))

    # bf16-rounded operands for references (kernel feeds bf16 to the MXU).
    x2d = x.reshape(B * S, H)
    xb = x2d.astype(jnp.bfloat16).astype(jnp.float32)
    wb = w.astype(jnp.bfloat16).astype(jnp.float32)
    hi = lax.Precision.HIGHEST

    # --- forward through the checkpointed, Pallas-backed layer (bf16 MXU) ---
    y = jax.jit(layer)(x)
    jax.block_until_ready(y)
    assert y.shape == (B, S, H)
    y_ref_bf16 = (jnp.dot(xb, wb, precision=hi) + b).reshape(B, S, H)
    assert jnp.allclose(y, y_ref_bf16, atol=1e-2, rtol=1e-2), float(
        jnp.max(jnp.abs(y - y_ref_bf16)))

    # --- pure-f32 compute path with tiny tiles: exercises the (2,2,2) grid and
    #     accumulator init/finalize against a tight tolerance. ---
    y_f32 = pallas_linear(x2d, w, b, tm=8, tn=128, tk=128,
                          compute_dtype=jnp.float32)
    jax.block_until_ready(y_f32)
    y_ref = jnp.dot(x2d, w, precision=hi) + b
    assert jnp.allclose(y_f32, y_ref, atol=1e-4, rtol=1e-4), float(
        jnp.max(jnp.abs(y_f32 - y_ref)))

    # --- bias-free kernel variant ---
    y_nb = pallas_linear(x2d, w, None, compute_dtype=jnp.float32)
    jax.block_until_ready(y_nb)
    assert jnp.allclose(y_nb, jnp.dot(x2d, w, precision=hi),
                        atol=1e-4, rtol=1e-4)

    # --- gradient through jax.checkpoint + custom_vjp (transpose-free Pallas
    #     backward matmuls, bf16 operands, f32 accumulation) ---
    dx = jax.jit(jax.grad(lambda xx: jnp.sum(layer(xx))))(x)
    jax.block_until_ready(dx)
    dx_ref = jnp.broadcast_to(jnp.sum(wb, axis=1), (B * S, H)).reshape(B, S, H)
    assert jnp.allclose(dx, dx_ref, atol=1e-2, rtol=1e-2), float(
        jnp.max(jnp.abs(dx - dx_ref)))

    # --- direct VJP check of the Pallas linear: dX, dW and the fused db ---
    ct = jax.random.normal(kg, (B * S, H), dtype=jnp.float32)
    ctb = ct.astype(jnp.bfloat16).astype(jnp.float32)
    _, vjp_fn = jax.vjp(_linear, x2d, w, b)
    dxe, dwe, dbe = vjp_fn(ct)
    jax.block_until_ready((dxe, dwe, dbe))
    assert jnp.allclose(dxe, jnp.dot(ctb, wb.T, precision=hi),
                        atol=1e-2, rtol=1e-2)
    assert jnp.allclose(dwe, jnp.dot(xb.T, ctb, precision=hi),
                        atol=1e-2, rtol=1e-2)
    assert jnp.allclose(dbe, jnp.sum(ctb, axis=0, keepdims=True),
                        atol=1e-2, rtol=1e-2)

    print("KERNEL_OK")
</pallas_src>

<mosaic_0001>
module attributes {stable_mosaic.version = 11 : i64} {
  func.func @_matmul_bias_kernel(%arg0: i32, %arg1: i32, %arg2: i32, %arg3: memref<16x256xbf16, #tpu.memory_space<vmem>>, %arg4: memref<256x128xbf16, #tpu.memory_space<vmem>>, %arg5: memref<1x128xf32, #tpu.memory_space<vmem>>, %arg6: memref<16x128xf32, #tpu.memory_space<vmem>>, %arg7: memref<16x128xf32, #tpu.memory_space<vmem>>) attributes {dimension_semantics = [#tpu.dimension_semantics<parallel>, #tpu.dimension_semantics<parallel>, #tpu.dimension_semantics<arbitrary>], iteration_bounds = array<i64: 1, 2, 1>, scalar_prefetch = 0 : i64, scratch_operands = 1 : i64, tpu.core_type = #tpu.core_type<tc>, window_params = [{transform_indices = @transform_0, window_bounds = array<i64: 16, 256>}, {transform_indices = @transform_1, window_bounds = array<i64: 256, 128>}, {transform_indices = @transform_2, window_bounds = array<i64: 1, 128>}, {transform_indices = @transform_3, window_bounds = array<i64: 16, 128>}]} {
    %c0_i32 = arith.constant 0 : i32
    %0 = arith.cmpi eq, %arg2, %c0_i32 : i32
    %1 = arith.extui %0 : i1 to i32
    %c0_i32_0 = arith.constant 0 : i32
    %2 = arith.cmpi ne, %1, %c0_i32_0 : i32
    scf.if %2 {
      %c0_10 = arith.constant 0 : index
      %c0_11 = arith.constant 0 : index
      %12 = vector.load %arg5[%c0_10, %c0_11] : memref<1x128xf32, #tpu.memory_space<vmem>>, vector<1x128xf32>
      %13 = vector.shape_cast %12 : vector<1x128xf32> to vector<1x128xf32>
      %14 = vector.broadcast %13 : vector<1x128xf32> to vector<16x128xf32>
      %c0_12 = arith.constant 0 : index
      %c0_13 = arith.constant 0 : index
      %15 = vector.load %arg7[%c0_12, %c0_13] : memref<16x128xf32, #tpu.memory_space<vmem>>, vector<16x128xf32>
      tpu.vector_store %arg7[%c0_12, %c0_13], %14 {strides = array<i32>} : memref<16x128xf32, #tpu.memory_space<vmem>>, vector<16x128xf32>,
    } else {
    }
    %c0 = arith.constant 0 : index
    %c0_1 = arith.constant 0 : index
    %3 = vector.load %arg7[%c0, %c0_1] : memref<16x128xf32, #tpu.memory_space<vmem>>, vector<16x128xf32>
    %c0_2 = arith.constant 0 : index
    %c0_3 = arith.constant 0 : index
    %4 = vector.load %arg3[%c0_2, %c0_3] : memref<16x256xbf16, #tpu.memory_space<vmem>>, vector<16x256xbf16>
    %c0_4 = arith.constant 0 : index
    %c0_5 = arith.constant 0 : index
    %5 = vector.load %arg4[%c0_4, %c0_5] : memref<256x128xbf16, #tpu.memory_space<vmem>>, vector<256x128xbf16>
    %cst = arith.constant dense<0.000000e+00> : vector<16x128xf32>
    %6 = tpu.matmul %4, %5, %cst {dimension_numbers = #tpu.dot_dimension_numbers<[1], [0], [0], [1], [0, 0, 1, 1], [], []>} : vector<16x256xbf16>, vector<256x128xbf16>, vector<16x128xf32> -> vector<16x128xf32>
    %7 = arith.addf %3, %6 : vector<16x128xf32>
    %c0_6 = arith.constant 0 : index
    %c0_7 = arith.constant 0 : index
    %8 = vector.load %arg7[%c0_6, %c0_7] : memref<16x128xf32, #tpu.memory_space<vmem>>, vector<16x128xf32>
    tpu.vector_store %arg7[%c0_6, %c0_7], %7 {strides = array<i32>} : memref<16x128xf32, #tpu.memory_space<vmem>>, vector<16x128xf32>,
    %c0_i32_8 = arith.constant 0 : i32
    %9 = arith.cmpi eq, %arg2, %c0_i32_8 : i32
    %10 = arith.extui %9 : i1 to i32
    %c0_i32_9 = arith.constant 0 : i32
    %11 = arith.cmpi ne, %10, %c0_i32_9 : i32
    scf.if %11 {
      %c0_10 = arith.constant 0 : index
      %c0_11 = arith.constant 0 : index
      %12 = vector.load %arg7[%c0_10, %c0_11] : memref<16x128xf32, #tpu.memory_space<vmem>>, vector<16x128xf32>
      %c0_12 = arith.constant 0 : index
      %c0_13 = arith.constant 0 : index
      %13 = vector.load %arg6[%c0_12, %c0_13] : memref<16x128xf32, #tpu.memory_space<vmem>>, vector<16x128xf32>
      tpu.vector_store %arg6[%c0_12, %c0_13], %12 {strides = array<i32>} : memref<16x128xf32, #tpu.memory_space<vmem>>, vector<16x128xf32>,
    } else {
    }
    return
  }
  func.func @transform_0(%arg0: i32, %arg1: i32, %arg2: i32) -> (i32, i32) {
    %c0_i32 = arith.constant 0 : i32
    return %arg0, %arg2 : i32, i32
  }
  func.func @transform_1(%arg0: i32, %arg1: i32, %arg2: i32) -> (i32, i32) {
    %c0_i32 = arith.constant 0 : i32
    return %arg2, %arg1 : i32, i32
  }
  func.func @transform_2(%arg0: i32, %arg1: i32, %arg2: i32) -> (i32, i32) {
    %c0_i32 = arith.constant 0 : i32
    %c0_i32_0 = arith.constant 0 : i32
    return %c0_i32, %arg1 : i32, i32
  }
  func.func @transform_3(%arg0: i32, %arg1: i32, %arg2: i32) -> (i32, i32) {
    %c0_i32 = arith.constant 0 : i32
    return %arg0, %arg1 : i32, i32
  }
}

</mosaic_0001>

<llo_original>
// kernel: checkpoint.1
$region0: #{checkpoint.1}
  #allocation0 [shape = 'u32[]', space=smem, size = 0x4, offset = 0x4, fixed_abs, tag = 'smem constant byte address 0x4 - core index']
  #allocation1 [shape = 'u32[144,128]{1,0:T(1,128)}', space=vmem, size = 0x12000, scoped, tag = 'internal scratch']
  #allocation2 [shape = 'f32[16,128]{1,0:T(8,128)}', space=vmem, size = 0x2000, scoped, tag = 'scratch operand']
  %s0 = inlined_call_operand.vmem [shape: bf16[16,256], index: 0, kind: input, shape index: {}]
  %s1 = inlined_call_operand.vmem [shape: bf16[256,256], index: 1, kind: input, shape index: {}]
  %s2 = inlined_call_operand.vmem [shape: f32[1,256], index: 2, kind: input, shape index: {}]
  %s3 = inlined_call_operand.hbm [shape: f32[16,256], index: 3, kind: output, shape index: {}]
  %s4 = sld [smem:[#allocation0]]
  $region94: #{checkpoint.1} parent=0
    _
  %s6 = ssub.s32 1, %s4
  %s7 = scalar_select 0, %s6, %s4
  $region1: #{checkpoint.1} parent=0
    #allocation3 [shape = 'u8[131072]{0}', space=vmem, size = 0x20000, scoped, tag = 'input window, operand 1']
    #allocation4 [shape = 'u8[16384]{0}', space=vmem, size = 0x4000, scoped, tag = 'output window, operand 0']
    #allocation5 [shape = 's32[2]{0}', space=sflag, size = 0x8, scoped, tag = 'scoped memory for checkpoint.1']
    %8 = vsyncpa [#allocation5], 0
    %s9 = scalar_lea.sflag [#allocation5], 1
    %10 = vsyncpa %s9, 0
    loop: start=0, step=1, limit=4
    $region2: #{checkpoint.1} parent=1 // loop_pre_header
      _
    $region3: #{checkpoint.1} parent=1 // loop_header
      %s12 = sphi 0, %s16
      %p13 = scmp.ge.s32.totalorder %s12, 4
      %s19 = sphi 0, %s38
      %s20 = sphi 0, %s34
      %s21 = sphi 0, %s30
      %s22 = sphi 0, %s19
      %s23 = sphi 0, %s20
      %s24 = sphi 0, %s21
      %s25 = sphi 0, %s22
      %s26 = sphi 0, %s23
      %s27 = sphi 0, %s24
      %s43 = sphi 0, %s45
      %s46 = sphi 0, %s43
      %s47 = sphi 0, %s46
      %s63 = sphi 0, %s47
      %s71 = sphi 0, %s73
      %s74 = sphi 0, %s71
      %s75 = sphi 0, %s74
      %s91 = sphi 0, %s75
      %s97 = sphi 0, %s99
      %s100 = sphi 0, %s97
      %s101 = sphi 0, %s100
      %s117 = sphi 0, %s101
      %s125 = sphi 0, %s127
      %s128 = sphi 0, %s125
      %s129 = sphi 0, %s128
      %s145 = sphi 0, %s129
    $region4: #{checkpoint.1} parent=1 // loop_header_branch
      %15 = sbr.rel (%p13) target = $region8
    $region5: #{checkpoint.1} parent=1 // loop_body
      %s17 = ssub.s32 %s12, 1
      %s18 = ssub.s32 %s12, 2
      %s28 = sadd.s32 1, %s21
      %p29 = scmp.ge.s32.totalorder %s28, 1
      %s30 = scalar_select %p29, 0, %s28
      %s31 = sadd.s32 1, %s20
      %s32 = scalar_select %p29, %s31, %s20
      %p33 = scmp.ge.s32.totalorder %s32, 2
      %s34 = scalar_select %p33, 0, %s32
      %s35 = sadd.s32 1, %s19
      %s36 = scalar_select %p33, %s35, %s19
      %p37 = scmp.ge.s32.totalorder %s36, 1
      %s38 = scalar_select %p37, 0, %s36
      %s39 = ssub.s32 %s19, %s38
      %s40 = ssub.s32 %s21, %s30
      %s41 = sor.u32 %s39, %s40
      %p42 = scmp.eq.s32.totalorder %s41, 0
      %s44 = sadd.s32 %s43, 1
      %s45 = scalar_select %p42, %s43, %s44
      %p48 = pneg %p42
      %p49 = scmp.eq.s32.totalorder %s12, 1
      %p50 = por %p48, %p49
      %p51 = scmp.ne.s32.totalorder %s43, %s46
      %p52 = scmp.eq.s32.totalorder %s12, 0
      %p53 = por %p51, %p52
      %p54 = scmp.ne.s32.totalorder %s43, %s46
      %p55 = scmp.eq.s32.totalorder %s17, 1
      %p56 = por %p54, %p55
      %p57 = scmp.ne.s32.totalorder %s46, %s47
      %p58 = scmp.eq.s32.totalorder %s17, 0
      %p59 = por %p57, %p58
      %p60 = scmp.ne.s32.totalorder %s46, %s47
      %p61 = scmp.eq.s32.totalorder %s18, 1
      %p62 = por %p60, %p61
      %p64 = scmp.ne.s32.totalorder %s47, %s63
      %p65 = scmp.eq.s32.totalorder %s18, 0
      %p66 = por %p64, %p65
      %s67 = ssub.s32 %s21, %s30
      %s68 = ssub.s32 %s20, %s34
      %s69 = sor.u32 %s67, %s68
      %p70 = scmp.eq.s32.totalorder %s69, 0
      %s72 = sadd.s32 %s71, 1
      %s73 = scalar_select %p70, %s71, %s72
      %p76 = pneg %p70
      %p77 = scmp.eq.s32.totalorder %s12, 1
      %p78 = por %p76, %p77
      %p79 = scmp.ne.s32.totalorder %s71, %s74
      %p80 = scmp.eq.s32.totalorder %s12, 0
      %p81 = por %p79, %p80
      %p82 = scmp.ne.s32.totalorder %s71, %s74
      %p83 = scmp.eq.s32.totalorder %s17, 1
      %p84 = por %p82, %p83
      %p85 = scmp.ne.s32.totalorder %s74, %s75
      %p86 = scmp.eq.s32.totalorder %s17, 0
      %p87 = por %p85, %p86
      %p88 = scmp.ne.s32.totalorder %s74, %s75
      %p89 = scmp.eq.s32.totalorder %s18, 1
      %p90 = por %p88, %p89
      %p92 = scmp.ne.s32.totalorder %s75, %s91
      %p93 = scmp.eq.s32.totalorder %s18, 0
      %p94 = por %p92, %p93
      %s95 = ssub.s32 %s20, %s34
      %p96 = scmp.eq.s32.totalorder %s95, 0
      %s98 = sadd.s32 %s97, 1
      %s99 = scalar_select %p96, %s97, %s98
      %p102 = pneg %p96
      %p103 = scmp.eq.s32.totalorder %s12, 1
      %p104 = por %p102, %p103
      %p105 = scmp.ne.s32.totalorder %s97, %s100
      %p106 = scmp.eq.s32.totalorder %s12, 0
      %p107 = por %p105, %p106
      %p108 = scmp.ne.s32.totalorder %s97, %s100
      %p109 = scmp.eq.s32.totalorder %s17, 1
      %p110 = por %p108, %p109
      %p111 = scmp.ne.s32.totalorder %s100, %s101
      %p112 = scmp.eq.s32.totalorder %s17, 0
      %p113 = por %p111, %p112
      %p114 = scmp.ne.s32.totalorder %s100, %s101
      %p115 = scmp.eq.s32.totalorder %s18, 1
      %p116 = por %p114, %p115
      %p118 = scmp.ne.s32.totalorder %s101, %s117
      %p119 = scmp.eq.s32.totalorder %s18, 0
      %p120 = por %p118, %p119
      %s121 = ssub.s32 %s19, %s38
      %s122 = ssub.s32 %s20, %s34
      %s123 = sor.u32 %s121, %s122
      %p124 = scmp.eq.s32.totalorder %s123, 0
      %s126 = sadd.s32 %s125, 1
      %s127 = scalar_select %p124, %s125, %s126
      %p130 = pneg %p124
      %p131 = scmp.eq.s32.totalorder %s12, 1
      %p132 = por %p130, %p131
      %p133 = scmp.ne.s32.totalorder %s125, %s128
      %p134 = scmp.eq.s32.totalorder %s12, 0
      %p135 = por %p133, %p134
      %p136 = scmp.ne.s32.totalorder %s125, %s128
      %p137 = scmp.eq.s32.totalorder %s17, 1
      %p138 = por %p136, %p137
      %p139 = scmp.ne.s32.totalorder %s128, %s129
      %p140 = scmp.eq.s32.totalorder %s17, 0
      %p141 = por %p139, %p140
      %p142 = scmp.ne.s32.totalorder %s128, %s129
      %p143 = scmp.eq.s32.totalorder %s18, 1
      %p144 = por %p142, %p143
      %p146 = scmp.ne.s32.totalorder %s129, %s145
      %p147 = scmp.eq.s32.totalorder %s18, 0
      %p148 = por %p146, %p147
      %p149 = scmp.le.s32.totalorder 1, %s12
      %p150 = scmp.lt.s32.totalorder %s12, 3
      %p151 = pnand %p149, %p150
      %p152 = pneg %p151
      // Predicated region
      $region9: #{checkpoint.1} parent=5 // pred_check
        _
      $region10: #{checkpoint.1} parent=5 // pred_check_branch
        %154 = sbr.rel (%p151) target = $region12
      $region11: #{checkpoint.1} parent=5 // pred_region
        %s155 = ssub.s32 %s12, 1
        // Predicated region
        $region13: #{checkpoint.1} parent=11 // pred_check
          %p156 = pneg %p59
        $region14: #{checkpoint.1} parent=11 // pred_check_branch
          %158 = sbr.rel (%p156) target = $region16
        $region15: #{checkpoint.1} parent=11 // pred_region
          %s159 = smul.u32 2, %s22
          %s160 = smul.u32 2, %s24
          %p161 = scmp.lt.s32.totalorder %s159, 1
          %s162 = scalar_select %p161, %s159, 1
          %p163 = scmp.lt.s32.totalorder %s160, 1
          %s164 = scalar_select %p163, %s160, 1
          %s165 = smul.addr %s162, 2
          %s166 = sadd.s32 %s164, %s165
          %s167 = smul.addr %s166, 4
          %s168 = scalar_lea.vmem %s0, %s167
          %s169 = smul.u32 2, %s22
          %s170 = smul.u32 2, %s24
        $region16: #{checkpoint.1} parent=11 // pred_fallthru
          _
      $region12: #{checkpoint.1} parent=5 // pred_fallthru
        _
      %p171 = scmp.lt.s32.totalorder %s12, 2
      // Predicated region
      $region17: #{checkpoint.1} parent=5 // pred_check
        %p172 = pneg %p171
      $region18: #{checkpoint.1} parent=5 // pred_check_branch
        %174 = sbr.rel (%p172) target = $region20
      $region19: #{checkpoint.1} parent=5 // pred_region
        // Predicated region
        $region21: #{checkpoint.1} parent=19 // pred_check
          %p175 = pneg %p81
        $region22: #{checkpoint.1} parent=19 // pred_check_branch
          %177 = sbr.rel (%p175) target = $region24
        $region23: #{checkpoint.1} parent=19 // pred_region
          %s178 = sand.u32 %s71, 1
          %s179 = sand.u32 %s71, 1
          %s180 = smul.addr %s179, 128
          %s181 = scalar_lea.vmem [#allocation3], %s180
          %s182 = smul.u32 32, %s21
          %s183 = smul.addr %s182, 2
          %s184 = sadd.s32 %s20, %s183
          %s185 = smul.addr %s184, 4
          %s186 = scalar_lea.vmem %s1, %s185
          // Predicated region
          $region25: #{checkpoint.1} parent=23 // pred_check
            _
          $region26: #{checkpoint.1} parent=23 // pred_check_branch
            %188 = sbr.rel (0) target = $region28
          $region27: #{checkpoint.1} parent=23 // pred_region
            // Predicated region
            $region29: #{checkpoint.1} parent=27 // pred_check
              _
            $region30: #{checkpoint.1} parent=27 // pred_check_branch
              %190 = sbr.rel target = $region32
            $region31: #{checkpoint.1} parent=27 // pred_region
              // Predicated region
              $region44: #{checkpoint.1} parent=31 // pred_check
                _
              $region45: #{checkpoint.1} parent=31 // pred_check_branch
                %267 = sbr.rel (0) target = $region47
              $region46: #{checkpoint.1} parent=31 // pred_region
                loop: start=0, step=1, limit=1
                $region48: #{checkpoint.1} parent=46 // loop_pre_header
                  _
                $region49: #{checkpoint.1} parent=46 // loop_header
                  %s269 = sphi 0, %s273
                  %p270 = scmp.ge.s32.totalorder %s269, 1
                  %s274 = sphi %s186, %s186
                  %s275 = sphi %s181, %s181
                $region50: #{checkpoint.1} parent=46 // loop_header_branch
                  %272 = sbr.rel (%p270) target = $region54
                $region51: #{checkpoint.1} parent=46 // loop_body
                  _
                $region52: #{checkpoint.1} parent=46 // loop_footer
                  %s273 = sadd.s32 1, %s269
                $region53: #{checkpoint.1} parent=46 // loop_footer_branch
                  %268 = sbr.rel target = $region49
                $region54: #{checkpoint.1} parent=46 // loop_exit
                  _
                loop: start=0, step=1, limit=1
                $region55: #{checkpoint.1} parent=46 // loop_pre_header
                  _
                $region56: #{checkpoint.1} parent=46 // loop_header
                  %s278 = sphi 0, %s282
                  %p279 = scmp.ge.s32.totalorder %s278, 1
                  %s283 = sphi %s186, %s186
                  %s284 = sphi %s181, %s181
                $region57: #{checkpoint.1} parent=46 // loop_header_branch
                  %281 = sbr.rel (%p279) target = $region61
                $region58: #{checkpoint.1} parent=46 // loop_body
                  %v285 = vld [vmem:[%s283] sm:$0xf]
                  %286 = vst [vmem:[%s284] sm:$0xf] %v285
                  %v287 = vld [vmem:[%s283 + $0x8] sm:$0xf]
                  %288 = vst [vmem:[%s284 + $0x4] sm:$0xf] %v287
                  %v289 = vld [vmem:[%s283 + $0x10] sm:$0xf]
                  %290 = vst [vmem:[%s284 + $0x8] sm:$0xf] %v289
                  %v291 = vld [vmem:[%s283 + $0x18] sm:$0xf]
                  %292 = vst [vmem:[%s284 + $0xc] sm:$0xf] %v291
                  %v293 = vld [vmem:[%s283 + $0x20] sm:$0xf]
                  %294 = vst [vmem:[%s284 + $0x10] sm:$0xf] %v293
                  %v295 = vld [vmem:[%s283 + $0x28] sm:$0xf]
                  %296 = vst [vmem:[%s284 + $0x14] sm:$0xf] %v295
                  %v297 = vld [vmem:[%s283 + $0x30] sm:$0xf]
                  %298 = vst [vmem:[%s284 + $0x18] sm:$0xf] %v297
                  %v299 = vld [vmem:[%s283 + $0x38] sm:$0xf]
                  %300 = vst [vmem:[%s284 + $0x1c] sm:$0xf] %v299
                  %v301 = vld [vmem:[%s283 + $0x40] sm:$0xf]
                  %302 = vst [vmem:[%s284 + $0x20] sm:$0xf] %v301
                  %v303 = vld [vmem:[%s283 + $0x48] sm:$0xf]
                  %304 = vst [vmem:[%s284 + $0x24] sm:$0xf] %v303
                  %v305 = vld [vmem:[%s283 + $0x50] sm:$0xf]
                  %306 = vst [vmem:[%s284 + $0x28] sm:$0xf] %v305
                  %v307 = vld [vmem:[%s283 + $0x58] sm:$0xf]
                  %308 = vst [vmem:[%s284 + $0x2c] sm:$0xf] %v307
                  %v309 = vld [vmem:[%s283 + $0x60] sm:$0xf]
                  %310 = vst [vmem:[%s284 + $0x30] sm:$0xf] %v309
                  %v311 = vld [vmem:[%s283 + $0x68] sm:$0xf]
                  %312 = vst [vmem:[%s284 + $0x34] sm:$0xf] %v311
                  %v313 = vld [vmem:[%s283 + $0x70] sm:$0xf]
                  %314 = vst [vmem:[%s284 + $0x38] sm:$0xf] %v313
                  %v315 = vld [vmem:[%s283 + $0x78] sm:$0xf]
                  %316 = vst [vmem:[%s284 + $0x3c] sm:$0xf] %v315
                  %v317 = vld [vmem:[%s283 + $0x80] sm:$0xf]
                  %318 = vst [vmem:[%s284 + $0x40] sm:$0xf] %v317
                  %v319 = vld [vmem:[%s283 + $0x88] sm:$0xf]
                  %320 = vst [vmem:[%s284 + $0x44] sm:$0xf] %v319
                  %v321 = vld [vmem:[%s283 + $0x90] sm:$0xf]
                  %322 = vst [vmem:[%s284 + $0x48] sm:$0xf] %v321
                  %v323 = vld [vmem:[%s283 + $0x98] sm:$0xf]
                  %324 = vst [vmem:[%s284 + $0x4c] sm:$0xf] %v323
                  %v325 = vld [vmem:[%s283 + $0xa0] sm:$0xf]
                  %326 = vst [vmem:[%s284 + $0x50] sm:$0xf] %v325
                  %v327 = vld [vmem:[%s283 + $0xa8] sm:$0xf]
                  %328 = vst [vmem:[%s284 + $0x54] sm:$0xf] %v327
                  %v329 = vld [vmem:[%s283 + $0xb0] sm:$0xf]
                  %330 = vst [vmem:[%s284 + $0x58] sm:$0xf] %v329
                  %v331 = vld [vmem:[%s283 + $0xb8] sm:$0xf]
                  %332 = vst [vmem:[%s284 + $0x5c] sm:$0xf] %v331
                  %v333 = vld [vmem:[%s283 + $0xc0] sm:$0xf]
                  %334 = vst [vmem:[%s284 + $0x60] sm:$0xf] %v333
                  %v335 = vld [vmem:[%s283 + $0xc8] sm:$0xf]
                  %336 = vst [vmem:[%s284 + $0x64] sm:$0xf] %v335
                  %v337 = vld [vmem:[%s283 + $0xd0] sm:$0xf]
                  %338 = vst [vmem:[%s284 + $0x68] sm:$0xf] %v337
                  %v339 = vld [vmem:[%s283 + $0xd8] sm:$0xf]
                  %340 = vst [vmem:[%s284 + $0x6c] sm:$0xf] %v339
                  %v341 = vld [vmem:[%s283 + $0xe0] sm:$0xf]
                  %342 = vst [vmem:[%s284 + $0x70] sm:$0xf] %v341
                  %v343 = vld [vmem:[%s283 + $0xe8] sm:$0xf]
                  %344 = vst [vmem:[%s284 + $0x74] sm:$0xf] %v343
                  %v345 = vld [vmem:[%s283 + $0xf0] sm:$0xf]
                  %346 = vst [vmem:[%s284 + $0x78] sm:$0xf] %v345
                  %v347 = vld [vmem:[%s283 + $0xf8] sm:$0xf]
                  %348 = vst [vmem:[%s284 + $0x7c] sm:$0xf] %v347
                $region59: #{checkpoint.1} parent=46 // loop_footer
                  %s282 = sadd.s32 1, %s278
                $region60: #{checkpoint.1} parent=46 // loop_footer_branch
                  %277 = sbr.rel target = $region56
                $region61: #{checkpoint.1} parent=46 // loop_exit
                  _
              $region47: #{checkpoint.1} parent=31 // pred_fallthru
                _
            $region32: #{checkpoint.1} parent=27 // pred_fallthru
              _
            // Predicated region
            $region33: #{checkpoint.1} parent=27 // pred_check
              _
            $region34: #{checkpoint.1} parent=27 // pred_check_branch
              %192 = sbr.rel (0) target = $region36
            $region35: #{checkpoint.1} parent=27 // pred_region
              loop: start=0, step=1, limit=1
              $region37: #{checkpoint.1} parent=35 // loop_pre_header
                _
              $region38: #{checkpoint.1} parent=35 // loop_header
                %s195 = sphi 0, %s199
                %p196 = scmp.ge.s32.totalorder %s195, 1
                %s200 = sphi %s186, %s186
                %s201 = sphi %s181, %s181
              $region39: #{checkpoint.1} parent=35 // loop_header_branch
                %198 = sbr.rel (%p196) target = $region43
              $region40: #{checkpoint.1} parent=35 // loop_body
                %v202 = vld [vmem:[%s200] sm:$0xf]
                %203 = vst [vmem:[%s201] sm:$0xf] %v202
                %v204 = vld [vmem:[%s200 + $0x8] sm:$0xf]
                %205 = vst [vmem:[%s201 + $0x4] sm:$0xf] %v204
                %v206 = vld [vmem:[%s200 + $0x10] sm:$0xf]
                %207 = vst [vmem:[%s201 + $0x8] sm:$0xf] %v206
                %v208 = vld [vmem:[%s200 + $0x18] sm:$0xf]
                %209 = vst [vmem:[%s201 + $0xc] sm:$0xf] %v208
                %v210 = vld [vmem:[%s200 + $0x20] sm:$0xf]
                %211 = vst [vmem:[%s201 + $0x10] sm:$0xf] %v210
                %v212 = vld [vmem:[%s200 + $0x28] sm:$0xf]
                %213 = vst [vmem:[%s201 + $0x14] sm:$0xf] %v212
                %v214 = vld [vmem:[%s200 + $0x30] sm:$0xf]
                %215 = vst [vmem:[%s201 + $0x18] sm:$0xf] %v214
                %v216 = vld [vmem:[%s200 + $0x38] sm:$0xf]
                %217 = vst [vmem:[%s201 + $0x1c] sm:$0xf] %v216
                %v218 = vld [vmem:[%s200 + $0x40] sm:$0xf]
                %219 = vst [vmem:[%s201 + $0x20] sm:$0xf] %v218
                %v220 = vld [vmem:[%s200 + $0x48] sm:$0xf]
                %221 = vst [vmem:[%s201 + $0x24] sm:$0xf] %v220
                %v222 = vld [vmem:[%s200 + $0x50] sm:$0xf]
                %223 = vst [vmem:[%s201 + $0x28] sm:$0xf] %v222
                %v224 = vld [vmem:[%s200 + $0x58] sm:$0xf]
                %225 = vst [vmem:[%s201 + $0x2c] sm:$0xf] %v224
                %v226 = vld [vmem:[%s200 + $0x60] sm:$0xf]
                %227 = vst [vmem:[%s201 + $0x30] sm:$0xf] %v226
                %v228 = vld [vmem:[%s200 + $0x68] sm:$0xf]
                %229 = vst [vmem:[%s201 + $0x34] sm:$0xf] %v228
                %v230 = vld [vmem:[%s200 + $0x70] sm:$0xf]
                %231 = vst [vmem:[%s201 + $0x38] sm:$0xf] %v230
                %v232 = vld [vmem:[%s200 + $0x78] sm:$0xf]
                %233 = vst [vmem:[%s201 + $0x3c] sm:$0xf] %v232
                %v234 = vld [vmem:[%s200 + $0x80] sm:$0xf]
                %235 = vst [vmem:[%s201 + $0x40] sm:$0xf] %v234
                %v236 = vld [vmem:[%s200 + $0x88] sm:$0xf]
                %237 = vst [vmem:[%s201 + $0x44] sm:$0xf] %v236
                %v238 = vld [vmem:[%s200 + $0x90] sm:$0xf]
                %239 = vst [vmem:[%s201 + $0x48] sm:$0xf] %v238
                %v240 = vld [vmem:[%s200 + $0x98] sm:$0xf]
                %241 = vst [vmem:[%s201 + $0x4c] sm:$0xf] %v240
                %v242 = vld [vmem:[%s200 + $0xa0] sm:$0xf]
                %243 = vst [vmem:[%s201 + $0x50] sm:$0xf] %v242
                %v244 = vld [vmem:[%s200 + $0xa8] sm:$0xf]
                %245 = vst [vmem:[%s201 + $0x54] sm:$0xf] %v244
                %v246 = vld [vmem:[%s200 + $0xb0] sm:$0xf]
                %247 = vst [vmem:[%s201 + $0x58] sm:$0xf] %v246
                %v248 = vld [vmem:[%s200 + $0xb8] sm:$0xf]
                %249 = vst [vmem:[%s201 + $0x5c] sm:$0xf] %v248
                %v250 = vld [vmem:[%s200 + $0xc0] sm:$0xf]
                %251 = vst [vmem:[%s201 + $0x60] sm:$0xf] %v250
                %v252 = vld [vmem:[%s200 + $0xc8] sm:$0xf]
                %253 = vst [vmem:[%s201 + $0x64] sm:$0xf] %v252
                %v254 = vld [vmem:[%s200 + $0xd0] sm:$0xf]
                %255 = vst [vmem:[%s201 + $0x68] sm:$0xf] %v254
                %v256 = vld [vmem:[%s200 + $0xd8] sm:$0xf]
                %257 = vst [vmem:[%s201 + $0x6c] sm:$0xf] %v256
                %v258 = vld [vmem:[%s200 + $0xe0] sm:$0xf]
                %259 = vst [vmem:[%s201 + $0x70] sm:$0xf] %v258
                %v260 = vld [vmem:[%s200 + $0xe8] sm:$0xf]
                %261 = vst [vmem:[%s201 + $0x74] sm:$0xf] %v260
                %v262 = vld [vmem:[%s200 + $0xf0] sm:$0xf]
                %263 = vst [vmem:[%s201 + $0x78] sm:$0xf] %v262
                %v264 = vld [vmem:[%s200 + $0xf8] sm:$0xf]
                %265 = vst [vmem:[%s201 + $0x7c] sm:$0xf] %v264
              $region41: #{checkpoint.1} parent=35 // loop_footer
                %s199 = sadd.s32 1, %s195
              $region42: #{checkpoint.1} parent=35 // loop_footer_branch
                %194 = sbr.rel target = $region38
              $region43: #{checkpoint.1} parent=35 // loop_exit
                _
            $region36: #{checkpoint.1} parent=27 // pred_fallthru
              _
          $region28: #{checkpoint.1} parent=23 // pred_fallthru
            _
          %349 = vnop
        $region24: #{checkpoint.1} parent=19 // pred_fallthru
          _
        // Predicated region
        $region62: #{checkpoint.1} parent=19 // pred_check
          %p350 = pneg %p107
        $region63: #{checkpoint.1} parent=19 // pred_check_branch
          %352 = sbr.rel (%p350) target = $region65
        $region64: #{checkpoint.1} parent=19 // pred_region
          %p353 = scmp.lt.s32.totalorder %s20, 1
          %s354 = scalar_select %p353, %s20, 1
          %s355 = scalar_lea.vmem %s2, %s354
        $region65: #{checkpoint.1} parent=19 // pred_fallthru
          _
      $region20: #{checkpoint.1} parent=5 // pred_fallthru
        _
      %p356 = scmp.le.s32.totalorder 1, %s12
      %p357 = scmp.lt.s32.totalorder %s12, 3
      %p358 = pnand %p356, %p357
      %p359 = pneg %p358
      // Predicated region
      $region66: #{checkpoint.1} parent=5 // pred_check
        _
      $region67: #{checkpoint.1} parent=5 // pred_check_branch
        %361 = sbr.rel (%p358) target = $region69
      $region68: #{checkpoint.1} parent=5 // pred_region
        %s362 = ssub.s32 %s12, 1
        %s363 = sand.u32 %s74, 1
        %s364 = sand.u32 %s74, 1
        %s365 = smul.addr %s364, 128
        %s366 = scalar_lea.vmem [#allocation3], %s365
        // Predicated region
        $region70: #{checkpoint.1} parent=68 // pred_check
          %p367 = pneg %p87
        $region71: #{checkpoint.1} parent=68 // pred_check_branch
          %369 = sbr.rel (%p367) target = $region73
        $region72: #{checkpoint.1} parent=68 // pred_region
          _
        $region73: #{checkpoint.1} parent=68 // pred_fallthru
          _
        %s370 = smul.u32 2, %s22
        %s371 = smul.u32 2, %s24
        %p372 = scmp.lt.s32.totalorder %s370, 1
        %s373 = scalar_select %p372, %s370, 1
        %p374 = scmp.lt.s32.totalorder %s371, 1
        %s375 = scalar_select %p374, %s371, 1
        %s376 = smul.addr %s373, 2
        %s377 = sadd.s32 %s375, %s376
        %s378 = smul.addr %s377, 4
        %s379 = scalar_lea.vmem %s0, %s378
        %p380 = pneg %p59
        %p381 = pneg %p56
        %s382 = sand.u32 %s74, 1
        %s383 = sand.u32 %s74, 1
        %s384 = smul.addr %s383, 128
        %s385 = scalar_lea.vmem [#allocation3], %s384
        %p386 = pneg %p87
        %p387 = pneg %p84
        %p388 = scmp.lt.s32.totalorder %s23, 1
        %s389 = scalar_select %p388, %s23, 1
        %s390 = scalar_lea.vmem %s2, %s389
        %p391 = pneg %p113
        %p392 = pneg %p110
        %p393 = pneg %p141
        %p394 = pneg %p138
        %s395 = sand.u32 %s128, 1
        %s396 = scalar_lea.sflag [#allocation5], %s395
        %s397 = sand.u32 %s128, 1
        %s398 = smul.addr %s397, 16
        %s399 = scalar_lea.vmem [#allocation4], %s398
        %s400 = smul.u32 2, %s22
        %s401 = smul.u32 2, %s24
        %p402 = scmp.lt.s32.totalorder %s400, 1
        %s403 = scalar_select %p402, %s400, 1
        %p404 = scmp.lt.s32.totalorder %s401, 1
        %s405 = scalar_select %p404, %s401, 1
        %s406 = smul.addr %s403, 2
        %s407 = sadd.s32 %s405, %s406
        %s408 = smul.addr %s407, 4
        %s409 = scalar_lea.vmem %s0, %s408
        %s410 = smul.u32 2, %s22
        %s411 = smul.u32 2, %s24
        %s412 = smul.u32 32, %s24
        %p413 = scmp.lt.s32.totalorder %s23, 1
        %s414 = scalar_select %p413, %s23, 1
        %s415 = scalar_lea.vmem %s2, %s414
        %s416 = smul.u32 2, %s22
        %p418 = scmp.eq.s32.totalorder %s24, 0
        // Predicated region
        $region74: #{checkpoint.1} parent=68 // pred_check
          %p419 = pneg %p418
        $region75: #{checkpoint.1} parent=68 // pred_check_branch
          %421 = sbr.rel (%p419) target = $region77
        $region76: #{checkpoint.1} parent=68 // pred_region
          %v422 = vld [vmem:[%s415] sm:$0x1]
          %v424 = vlaneseq
          %v425 = vshrl.u32 %v424, 7
          %v426 = vsub.s32 0, %v425
          %v427 = vrot.slane %v422, %v426
          %429 = vst [vmem:[#allocation2] sm:$0xff] %v427
          %430 = vst [vmem:[#allocation2 + $0x8] sm:$0xff] %v427
        $region77: #{checkpoint.1} parent=68 // pred_fallthru
          _
        %v431 = vld [vmem:[#allocation2] sm:$0xff]
        %v432 = vld [vmem:[#allocation2 + $0x8] sm:$0xff]
        %v433 = vld [vmem:[%s409] sm:$0xff]
        %v434 = vld [vmem:[%s409 + $0x8] sm:$0xff]
        %v435 = vld [vmem:[%s366] sm:$0xf]
        %v436 = vld [vmem:[%s366 + $0x4] sm:$0xf]
        %v437 = vld [vmem:[%s366 + $0x8] sm:$0xf]
        %v438 = vld [vmem:[%s366 + $0xc] sm:$0xf]
        %v439 = vld [vmem:[%s366 + $0x10] sm:$0xf]
        %v440 = vld [vmem:[%s366 + $0x14] sm:$0xf]
        %v441 = vld [vmem:[%s366 + $0x18] sm:$0xf]
        %v442 = vld [vmem:[%s366 + $0x1c] sm:$0xf]
        %v443 = vld [vmem:[%s366 + $0x20] sm:$0xf]
        %v444 = vld [vmem:[%s366 + $0x24] sm:$0xf]
        %v445 = vld [vmem:[%s366 + $0x28] sm:$0xf]
        %v446 = vld [vmem:[%s366 + $0x2c] sm:$0xf]
        %v447 = vld [vmem:[%s366 + $0x30] sm:$0xf]
        %v448 = vld [vmem:[%s366 + $0x34] sm:$0xf]
        %v449 = vld [vmem:[%s366 + $0x38] sm:$0xf]
        %v450 = vld [vmem:[%s366 + $0x3c] sm:$0xf]
        %v451 = vld [vmem:[%s366 + $0x40] sm:$0xf]
        %v452 = vld [vmem:[%s366 + $0x44] sm:$0xf]
        %v453 = vld [vmem:[%s366 + $0x48] sm:$0xf]
        %v454 = vld [vmem:[%s366 + $0x4c] sm:$0xf]
        %v455 = vld [vmem:[%s366 + $0x50] sm:$0xf]
        %v456 = vld [vmem:[%s366 + $0x54] sm:$0xf]
        %v457 = vld [vmem:[%s366 + $0x58] sm:$0xf]
        %v458 = vld [vmem:[%s366 + $0x5c] sm:$0xf]
        %v459 = vld [vmem:[%s366 + $0x60] sm:$0xf]
        %v460 = vld [vmem:[%s366 + $0x64] sm:$0xf]
        %v461 = vld [vmem:[%s366 + $0x68] sm:$0xf]
        %v462 = vld [vmem:[%s366 + $0x6c] sm:$0xf]
        %v463 = vld [vmem:[%s366 + $0x70] sm:$0xf]
        %v464 = vld [vmem:[%s366 + $0x74] sm:$0xf]
        %v465 = vld [vmem:[%s366 + $0x78] sm:$0xf]
        %v466 = vld [vmem:[%s366 + $0x7c] sm:$0xf]
        %v469 = vunpack.c.l.b16 %v433
        %v470 = vunpack.c.h.b16 %v433
        %v471 = vunpack.c.l.b16 %v434
        %v472 = vunpack.c.h.b16 %v434
        %v473 = vpack.c.b16 %v471, %v469
        %v474 = vpack.c.b16 %v472, %v470
        %v509 = vunpack.c.l.b16 %v435
        %v510 = vunpack.c.l.b16 %v436
        %v511 = vunpack.c.l.b16 %v437
        %v512 = vunpack.c.l.b16 %v438
        %v513 = vunpack.c.l.b16 %v439
        %v514 = vunpack.c.l.b16 %v440
        %v515 = vunpack.c.l.b16 %v441
        %v516 = vunpack.c.l.b16 %v442
        %v517 = vunpack.c.l.b16 %v443
        %v518 = vunpack.c.l.b16 %v444
        %v519 = vunpack.c.l.b16 %v445
        %v520 = vunpack.c.l.b16 %v446
        %v521 = vunpack.c.l.b16 %v447
        %v522 = vunpack.c.l.b16 %v448
        %v523 = vunpack.c.l.b16 %v449
        %v524 = vunpack.c.l.b16 %v450
        %v525 = vunpack.c.l.b16 %v451
        %v526 = vunpack.c.l.b16 %v452
        %v527 = vunpack.c.l.b16 %v453
        %v528 = vunpack.c.l.b16 %v454
        %v529 = vunpack.c.l.b16 %v455
        %v530 = vunpack.c.l.b16 %v456
        %v531 = vunpack.c.l.b16 %v457
        %v532 = vunpack.c.l.b16 %v458
        %v533 = vunpack.c.l.b16 %v459
        %v534 = vunpack.c.l.b16 %v460
        %v535 = vunpack.c.l.b16 %v461
        %v536 = vunpack.c.l.b16 %v462
        %v537 = vunpack.c.l.b16 %v463
        %v538 = vunpack.c.l.b16 %v464
        %v539 = vunpack.c.l.b16 %v465
        %v540 = vunpack.c.l.b16 %v466
        %v541 = vpack.c.b16 %v510, %v509
        %v542 = vpack.c.b16 %v512, %v511
        %v543 = vpack.c.b16 %v514, %v513
        %v544 = vpack.c.b16 %v516, %v515
        %v545 = vpack.c.b16 %v518, %v517
        %v546 = vpack.c.b16 %v520, %v519
        %v547 = vpack.c.b16 %v522, %v521
        %v548 = vpack.c.b16 %v524, %v523
        %v549 = vpack.c.b16 %v526, %v525
        %v550 = vpack.c.b16 %v528, %v527
        %v551 = vpack.c.b16 %v530, %v529
        %v552 = vpack.c.b16 %v532, %v531
        %v553 = vpack.c.b16 %v534, %v533
        %v554 = vpack.c.b16 %v536, %v535
        %v555 = vpack.c.b16 %v538, %v537
        %v556 = vpack.c.b16 %v540, %v539
        %573 = vmatprep.subr.bf16.mxu0 0
        %574 = vmatpush1.bf16.msra.mxu0 %v541
        %575 = vmatprep.subr.bf16.mxu0 0
        %576 = vmatpush1.bf16.msra.mxu0 %v542
        %577 = vmatprep.subr.bf16.mxu0 0
        %578 = vmatpush1.bf16.msra.mxu0 %v543
        %579 = vmatprep.subr.bf16.mxu0 0
        %580 = vmatpush1.bf16.msra.mxu0 %v544
        %581 = vmatprep.subr.bf16.mxu0 0
        %582 = vmatpush1.bf16.msra.mxu0 %v545
        %583 = vmatprep.subr.bf16.mxu0 0
        %584 = vmatpush1.bf16.msra.mxu0 %v546
        %585 = vmatprep.subr.bf16.mxu0 0
        %586 = vmatpush1.bf16.msra.mxu0 %v547
        %587 = vmatprep.subr.bf16.mxu0 0
        %588 = vmatpush1.bf16.msra.mxu0 %v548
        %589 = vmatprep.subr.bf16.mxu0 0
        %590 = vmatpush1.bf16.msra.mxu0 %v549
        %591 = vmatprep.subr.bf16.mxu0 0
        %592 = vmatpush1.bf16.msra.mxu0 %v550
        %593 = vmatprep.subr.bf16.mxu0 0
        %594 = vmatpush1.bf16.msra.mxu0 %v551
        %595 = vmatprep.subr.bf16.mxu0 0
        %596 = vmatpush1.bf16.msra.mxu0 %v552
        %597 = vmatprep.subr.bf16.mxu0 0
        %598 = vmatpush1.bf16.msra.mxu0 %v553
        %599 = vmatprep.subr.bf16.mxu0 0
        %600 = vmatpush1.bf16.msra.mxu0 %v554
        %601 = vmatprep.subr.bf16.mxu0 0
        %602 = vmatpush1.bf16.msra.mxu0 %v555
        %603 = vmatprep.subr.bf16.mxu0 0
        %604 = vmatpush1.bf16.msra.mxu0 %v556
        %605 = vmatprep.mubr.bf16.mxu0 %v474
        %606 = vmatmul.mubr.bf16.gmra.mrb[0].mxu0 %v473
        %v607 = vpop.f32.mrb[0].mxu0
        %v608 = vadd.f32 0.0, %v607
        %v609 = vpop.f32.mrb[0].mxu0
        %v610 = vpop.f32.mrb[0].mxu0
        %v611 = vadd.f32 0.0, %v610
        %v612 = vpop.f32.mrb[0].mxu0
        %613 = vdwg.mxu0
        %v614 = vadd.f32 %v431, %v608
        %v615 = vadd.f32 %v432, %v611
        %616 = vst [vmem:[#allocation2] sm:$0xff] %v614
        %617 = vst [vmem:[#allocation2 + $0x8] sm:$0xff] %v615
        // Predicated region
        $region78: #{checkpoint.1} parent=68 // pred_check
          %p618 = pneg %p418
        $region79: #{checkpoint.1} parent=68 // pred_check_branch
          %620 = sbr.rel (%p618) target = $region81
        $region80: #{checkpoint.1} parent=68 // pred_region
          %v621 = vld [vmem:[#allocation2] sm:$0xff]
          %v622 = vld [vmem:[#allocation2 + $0x8] sm:$0xff]
          %623 = vst [vmem:[%s399] sm:$0xff] %v621
          %624 = vst [vmem:[%s399 + $0x8] sm:$0xff] %v622
        $region81: #{checkpoint.1} parent=68 // pred_fallthru
          _
        %s625 = sand.u32 %s128, 1
        %s626 = scalar_lea.sflag [#allocation5], %s625
        %s627 = sand.u32 %s128, 1
        %s628 = smul.addr %s627, 16
        %s629 = scalar_lea.vmem [#allocation4], %s628
        // Predicated region
        $region82: #{checkpoint.1} parent=68 // pred_check
          %p630 = pneg %p138
        $region83: #{checkpoint.1} parent=68 // pred_check_branch
          %632 = sbr.rel (%p630) target = $region85
        $region84: #{checkpoint.1} parent=68 // pred_region
          %s633 = smul.u32 2, %s22
          %s635 = ssub.s32 256, 256
          %636 = vsyncadd %s626, %s635
          %s637 = smul.addr %s633, 2
          %s638 = sadd.s32 %s23, %s637
          %s639 = smul.addr %s638, 128
          %s640 = scalar_lea.hbm %s3, %s639
          %s641 = sshll.u32 %s629, 4
          %s642 = int_to_ptr.vmem [resolvable:$true] %s641
          %647 = dma.vmem_to_hbm [thread:$0]  %s642, 256, %s640, %s626, 128, 256, 8
        $region85: #{checkpoint.1} parent=68 // pred_fallthru
          _
      $region69: #{checkpoint.1} parent=5 // pred_fallthru
        _
      %p648 = scmp.le.s32.totalorder 2, %s12
      // Predicated region
      $region86: #{checkpoint.1} parent=5 // pred_check
        %p649 = pneg %p648
      $region87: #{checkpoint.1} parent=5 // pred_check_branch
        %651 = sbr.rel (%p649) target = $region89
      $region88: #{checkpoint.1} parent=5 // pred_region
        %s652 = ssub.s32 %s12, 2
        // Predicated region
        $region90: #{checkpoint.1} parent=88 // pred_check
          %p653 = pneg %p144
        $region91: #{checkpoint.1} parent=88 // pred_check_branch
          %655 = sbr.rel (%p653) target = $region93
        $region92: #{checkpoint.1} parent=88 // pred_region
          %s656 = sand.u32 %s129, 1
          %s657 = scalar_lea.sflag [#allocation5], %s656
          %s658 = sand.u32 %s129, 1
          %s659 = smul.addr %s658, 16
          %s660 = scalar_lea.vmem [#allocation4], %s659
          %661 = dma.done %s657, 256
        $region93: #{checkpoint.1} parent=88 // pred_fallthru
          _
      $region89: #{checkpoint.1} parent=5 // pred_fallthru
        _
    $region6: #{checkpoint.1} parent=1 // loop_footer
      %s16 = sadd.s32 1, %s12
    $region7: #{checkpoint.1} parent=1 // loop_footer_branch
      %11 = sbr.rel target = $region3
    $region8: #{checkpoint.1} parent=1 // loop_exit
      _
    %662 = vsyncpa [#allocation5], 1
    %s663 = scalar_lea.sflag [#allocation5], 1
    %664 = vsyncpa %s663, 1

</llo_original>
